<compile_context>
chip_gen: v5e
topology: v5e:2x2
jax: 0.10.0
libtpu: 0.0.40
codegen_flags: <defaults>
</compile_context>

<pallas_src>
import functools

import jax
import jax.numpy as jnp
from jax.experimental import pallas as pl
from jax.experimental.pallas import tpu as pltpu


def _round_up(x, m):
    return (x + m - 1) // m * m


_TARGET_ROWS = 512   # mem-bound tiling curve: ~512-row tiles hit ~85% of HBM BW


def _choose_m_tiling(B, N, target=_TARGET_ROWS):
    """Pick the M (= B*N) row tile.

    Returns (tm, mode, arg):
      mode == 'rep'  : tm = arg * N  — pos passed once, replicated in-kernel
      mode == 'div'  : tm divides N  — pos tile index is i % arg
      mode == 'bcast': fallback      — pos replicated over M in the wrapper
    """
    if N <= target:
        c = 0
        for cc in range(1, B + 1):
            if B % cc == 0 and cc * N <= target and (cc * N) % 8 == 0:
                c = cc
        if c:
            return c * N, 'rep', c
    tm = 0
    for d in range(8, min(N, target) + 1, 8):
        if N % d == 0:
            tm = d
    if tm:
        return tm, 'div', N // tm
    # TODO(synk): ragged N with no multiple-of-8 divisor; fall back to
    # replicating pos over M (extra HBM traffic, correctness unchanged).
    return min(_round_up(B * N, 8), target), 'bcast', None


def _choose_e_tile(K_pad, E_pad, tm, pos_tile_rows, out_bytes,
                   budget=24 * 1024 * 1024):
    """Largest 128-multiple divisor of E_pad whose double-buffered working set
    fits `budget` (v7x-safe).  Prefer te == E_pad so the weight stays resident
    with a constant index map (fetched from HBM exactly once)."""
    def need(te):
        return 2 * (tm * K_pad * 2 + K_pad * te * 2
                    + pos_tile_rows * te * 2 + tm * te * out_bytes)
    te = E_pad
    while te > 128 and (need(te) > budget or E_pad % te != 0):
        te -= 128
    return te


def _patch_embed_kernel(x_ref, w_ref, pos_ref, o_ref, *, rep):
    # x_ref:   (tm, K_pad)          bf16 patches
    # w_ref:   (K_pad, te)          bf16 projection weight
    # pos_ref: (pos_tile_rows, te)  bf16 pos-embed + conv-bias (pre-folded)
    # o_ref:   (tm, te)             output tile (x.dtype)
    proj = jnp.dot(x_ref[...], w_ref[...],
                   preferred_element_type=jnp.float32)       # MXU, f32 acc
    pos = pos_ref[...].astype(jnp.float32)                   # bf16 -> f32 (VPU slack)
    if rep > 1:            # static: tile pos over the `rep` stacked batch rows
        pos = jnp.concatenate([pos] * rep, axis=0)
    o_ref[...] = (proj + pos).astype(o_ref.dtype)


def patch_embed(x, conv_w, conv_b, pos_embs, patch_size):
    """x: (B, C, H, W) NCHW.  conv_w: (E, C, P, P).  conv_b: (E,).
    pos_embs: (1, N, E).  Returns (B, N, E) == Conv2d(P, P) -> flatten(2)
    -> transpose(1, 2) -> + pos_embs   (Dropout is identity at eval)."""
    B, C, H, W = x.shape
    E = conv_w.shape[0]
    P = patch_size
    Hp, Wp = H // P, W // P           # floor, matching Conv2d(stride=P)
    N = Hp * Wp
    K = C * P * P
    M = B * N

    K_pad = _round_up(K, 128)
    E_pad = _round_up(E, 128)

    tm, mode, arg = _choose_m_tiling(B, N)
    M_pad = _round_up(M, tm)          # exact (no pad) in 'rep' / 'div' modes
    grid_m = M_pad // tm
    rep = arg if mode == 'rep' else 1

    # ---- patches: (B, C, H, W) -> (M_pad, K_pad) bf16.  Cast BEFORE the 6-D
    # transpose so the materialized intermediate is half the bytes.
    # TODO(synk): for large images, patchify in-kernel from NHWC row slabs to
    # avoid this HBM round trip entirely (XLU is idle in this kernel).
    xb = x[:, :, :Hp * P, :Wp * P].astype(jnp.bfloat16)
    patches = xb.reshape(B, C, Hp, P, Wp, P).transpose(0, 2, 4, 1, 3, 5)
    patches = patches.reshape(M, K)
    patches = jnp.pad(patches, ((0, M_pad - M), (0, K_pad - K)))

    # ---- weight: Conv2d(kernel=stride=P) -> (K_pad, E_pad) bf16 matmul weight.
    w_mat = conv_w.reshape(E, K).T.astype(jnp.bfloat16)
    w_mat = jnp.pad(w_mat, ((0, K_pad - K), (0, E_pad - E)))

    # ---- pos-embed with conv bias folded in, bf16, NOT replicated over batch.
    pos = (pos_embs.reshape(N, E).astype(jnp.float32)
           + conv_b.astype(jnp.float32)).astype(jnp.bfloat16)       # (N, E)
    pos = jnp.pad(pos, ((0, 0), (0, E_pad - E)))                    # (N, E_pad)
    if mode == 'bcast':
        pos = jnp.broadcast_to(pos[None], (B, N, E_pad)).reshape(M, E_pad)
        pos = jnp.pad(pos, ((0, M_pad - M), (0, 0)))
    pos_tile_rows = N if mode == 'rep' else tm

    out_bytes = jnp.dtype(x.dtype).itemsize
    te = _choose_e_tile(K_pad, E_pad, tm, pos_tile_rows, out_bytes)
    grid_e = E_pad // te

    if mode == 'rep':
        pos_idx = lambda i, j: (0, j)
    elif mode == 'div':
        npos = arg
        pos_idx = lambda i, j: (i % npos, j)
    else:  # 'bcast'
        pos_idx = lambda i, j: (i, j)

    # Single-buffer the resident weight only when its index map is constant
    # across the grid AND it is big enough for double-buffering to hurt
    # (frees VMEM for larger M tiles on v7x); tiny shapes stay on defaults.
    w_kwargs = {}
    if grid_e == 1 and K_pad * E_pad * 2 >= (8 << 20):
        w_kwargs = dict(pipeline_mode=pl.Buffered(1))

    vmem_need = 2 * (tm * K_pad * 2 + K_pad * te * 2
                     + pos_tile_rows * te * 2 + tm * te * out_bytes)
    vmem_limit = None
    if vmem_need > 30 * 1024 * 1024:
        vmem_limit = min(vmem_need + (4 << 20), 64 * 1024 * 1024)

    cost = pl.CostEstimate(
        flops=2 * M_pad * K_pad * E_pad,
        bytes_accessed=(M_pad * K_pad * 2 + K_pad * E_pad * 2
                        + pos.size * 2 + M_pad * E_pad * out_bytes),
        transcendentals=0)

    out = pl.pallas_call(
        functools.partial(_patch_embed_kernel, rep=rep),
        out_shape=jax.ShapeDtypeStruct((M_pad, E_pad), x.dtype),
        grid_spec=pltpu.PrefetchScalarGridSpec(
            num_scalar_prefetch=0,
            grid=(grid_m, grid_e),
            in_specs=[
                pl.BlockSpec((tm, K_pad), lambda i, j: (i, 0)),            # patches
                pl.BlockSpec((K_pad, te), lambda i, j: (0, j), **w_kwargs),  # weight
                pl.BlockSpec((pos_tile_rows, te), pos_idx),                # pos+bias
            ],
            out_specs=pl.BlockSpec((tm, te), lambda i, j: (i, j)),
        ),
        compiler_params=pltpu.CompilerParams(
            dimension_semantics=("parallel", "parallel"),
            vmem_limit_bytes=vmem_limit),
        cost_estimate=cost,
    )(patches, w_mat, pos)

    # When E is a multiple of 128 and tm divides M exactly (the common case),
    # this slice/reshape is a view; otherwise it is the minimal copy needed to
    # match the PyTorch output layout.
    return out[:M, :E].reshape(B, N, E)


def _reference(x, conv_w, conv_b, pos_embs, patch_size):
    """Pure-JAX f32 reference matching the PyTorch forward (eval mode)."""
    B, C, H, W = x.shape
    E = conv_w.shape[0]
    P = patch_size
    Hp, Wp = H // P, W // P
    patches = x[:, :, :Hp * P, :Wp * P].reshape(B, C, Hp, P, Wp, P)
    patches = patches.transpose(0, 2, 4, 1, 3, 5).reshape(B, Hp * Wp, C * P * P)
    proj = jnp.einsum("bnk,ek->bne", patches, conv_w.reshape(E, -1)) + conv_b
    return proj + pos_embs


if __name__ == "__main__":
    # Module config: input_dim=4, img_size=16, patch_size=4, emb_dim=32
    input_dim, img_size, patch_size, emb_dim = 4, 16, 4, 32
    num_patches = (img_size // patch_size) ** 2            # 16
    B = 2

    key = jax.random.PRNGKey(0)
    kx, kw, kb, kp = jax.random.split(key, 4)

    x = jax.random.normal(kx, (B, input_dim, img_size, img_size), jnp.float32)
    conv_w = jax.random.normal(
        kw, (emb_dim, input_dim, patch_size, patch_size), jnp.float32) * 0.05
    conv_b = jax.random.normal(kb, (emb_dim,), jnp.float32) * 0.05
    # nn.Parameter init is zeros; use a small nonzero value to exercise the
    # pos-embed add path (parameter value, not a semantics change).
    pos_embs = jax.random.normal(kp, (1, num_patches, emb_dim), jnp.float32) * 0.02

    out = patch_embed(x, conv_w, conv_b, pos_embs, patch_size)
    out = jax.block_until_ready(out)

    ref = _reference(x, conv_w, conv_b, pos_embs, patch_size)
    assert out.shape == (B, num_patches, emb_dim), out.shape
    # bf16 MXU inputs / bf16 pos (f32 accumulation) -> allow ~1e-2 deviation.
    assert jnp.allclose(out, ref, atol=5e-2, rtol=5e-2), "mismatch vs reference"

    print("KERNEL_OK")
</pallas_src>

<mosaic_0001>
module attributes {stable_mosaic.version = 11 : i64} {
  func.func @_patch_embed_kernel(%arg0: i32, %arg1: i32, %arg2: memref<32x128xbf16, #tpu.memory_space<vmem>>, %arg3: memref<128x128xbf16, #tpu.memory_space<vmem>>, %arg4: memref<16x128xbf16, #tpu.memory_space<vmem>>, %arg5: memref<32x128xf32, #tpu.memory_space<vmem>>) attributes {dimension_semantics = [#tpu.dimension_semantics<parallel>, #tpu.dimension_semantics<parallel>], iteration_bounds = array<i64: 1, 1>, scalar_prefetch = 0 : i64, scratch_operands = 0 : i64, tpu.core_type = #tpu.core_type<tc>, window_params = [{transform_indices = @transform_0, window_bounds = array<i64: 32, 128>}, {transform_indices = @transform_1, window_bounds = array<i64: 128, 128>}, {transform_indices = @transform_2, window_bounds = array<i64: 16, 128>}, {transform_indices = @transform_3, window_bounds = array<i64: 32, 128>}]} {
    %c0 = arith.constant 0 : index
    %c0_0 = arith.constant 0 : index
    %0 = vector.load %arg2[%c0, %c0_0] : memref<32x128xbf16, #tpu.memory_space<vmem>>, vector<32x128xbf16>
    %c0_1 = arith.constant 0 : index
    %c0_2 = arith.constant 0 : index
    %1 = vector.load %arg3[%c0_1, %c0_2] : memref<128x128xbf16, #tpu.memory_space<vmem>>, vector<128x128xbf16>
    %cst = arith.constant dense<0.000000e+00> : vector<32x128xf32>
    %2 = tpu.matmul %0, %1, %cst {dimension_numbers = #tpu.dot_dimension_numbers<[1], [0], [0], [1], [0, 0, 1, 1], [], []>} : vector<32x128xbf16>, vector<128x128xbf16>, vector<32x128xf32> -> vector<32x128xf32>
    %c0_3 = arith.constant 0 : index
    %c0_4 = arith.constant 0 : index
    %3 = vector.load %arg4[%c0_3, %c0_4] : memref<16x128xbf16, #tpu.memory_space<vmem>>, vector<16x128xbf16>
    %4 = arith.extf %3 : vector<16x128xbf16> to vector<16x128xf32>
    %5 = tpu.concatenate %4, %4 in 0 : vector<16x128xf32>, vector<16x128xf32> -> vector<32x128xf32>
    %6 = arith.addf %2, %5 : vector<32x128xf32>
    %c0_5 = arith.constant 0 : index
    %c0_6 = arith.constant 0 : index
    %7 = vector.load %arg5[%c0_5, %c0_6] : memref<32x128xf32, #tpu.memory_space<vmem>>, vector<32x128xf32>
    tpu.vector_store %arg5[%c0_5, %c0_6], %6 {strides = array<i32>} : memref<32x128xf32, #tpu.memory_space<vmem>>, vector<32x128xf32>,
    return
  }
  func.func @transform_0(%arg0: i32, %arg1: i32) -> (i32, i32) {
    %c0_i32 = arith.constant 0 : i32
    %c0_i32_0 = arith.constant 0 : i32
    return %arg0, %c0_i32 : i32, i32
  }
  func.func @transform_1(%arg0: i32, %arg1: i32) -> (i32, i32) {
    %c0_i32 = arith.constant 0 : i32
    %c0_i32_0 = arith.constant 0 : i32
    return %c0_i32, %arg1 : i32, i32
  }
  func.func @transform_2(%arg0: i32, %arg1: i32) -> (i32, i32) {
    %c0_i32 = arith.constant 0 : i32
    %c0_i32_0 = arith.constant 0 : i32
    return %c0_i32, %arg1 : i32, i32
  }
  func.func @transform_3(%arg0: i32, %arg1: i32) -> (i32, i32) {
    %c0_i32 = arith.constant 0 : i32
    return %arg0, %arg1 : i32, i32
  }
}

</mosaic_0001>

<llo_original>
// kernel: tpu_custom_call.1
$region0: #{tpu_custom_call.1}
  #allocation0 [shape = 'u32[]', space=smem, size = 0x4, offset = 0x4, fixed_abs, tag = 'smem constant byte address 0x4 - core index']
  #allocation1 [shape = 'u32[72,128]{1,0:T(1,128)}', space=vmem, size = 0x9000, scoped, tag = 'internal scratch']
  %s0 = inlined_call_operand.hbm [shape: bf16[32,128], index: 0, kind: input, shape index: {}]
  %s1 = inlined_call_operand.hbm [shape: bf16[128,128], index: 1, kind: input, shape index: {}]
  %s2 = inlined_call_operand.hbm [shape: bf16[16,128], index: 2, kind: input, shape index: {}]
  %s3 = inlined_call_operand.hbm [shape: f32[32,128], index: 3, kind: output, shape index: {}]
  %s4 = sld [smem:[#allocation0]]
  $region34: #{tpu_custom_call.1} parent=0
    _
  %s6 = ssub.s32 1, %s4
  %s7 = scalar_select 0, %s6, %s4
  $region1: #{tpu_custom_call.1} parent=0
    #allocation2 [shape = 'u8[8192]{0}', space=vmem, size = 0x2000, scoped, tag = 'input window, operand 0, single buffered']
    #allocation3 [shape = 's32[1]{0}', space=sflag, size = 0x4, scoped, tag = 'scoped memory for tpu_custom_call.1']
    #allocation4 [shape = 's32[1]{0}', space=sflag, size = 0x4, scoped, tag = 'scoped memory for tpu_custom_call.1']
    #allocation5 [shape = 'u8[32768]{0}', space=vmem, size = 0x8000, scoped, tag = 'input window, operand 1, single buffered']
    #allocation6 [shape = 's32[1]{0}', space=sflag, size = 0x4, scoped, tag = 'scoped memory for tpu_custom_call.1']
    #allocation7 [shape = 'u8[4096]{0}', space=vmem, size = 0x1000, scoped, tag = 'input window, operand 2, single buffered']
    #allocation8 [shape = 'u8[16384]{0}', space=vmem, size = 0x4000, scoped, tag = 'output window, operand 0, single buffered']
    %8 = vsyncpa [#allocation3], 0
    %9 = vsyncpa [#allocation6], 0
    %10 = vsyncpa [#allocation4], 0
    // Predicated region
    $region2: #{tpu_custom_call.1} parent=1 // pred_check
      _
    $region3: #{tpu_custom_call.1} parent=1 // pred_check_branch
      %12 = sbr.rel (0) target = $region5
    $region4: #{tpu_custom_call.1} parent=1 // pred_region
      %14 = vsyncadd [#allocation3], 0
      %s15 = sshll.u32 %s0, 4
      %s16 = int_to_ptr.hbm [resolvable:$true] %s15
      %s17 = sshll.u32 [#allocation2], 4
      %s18 = int_to_ptr.vmem [resolvable:$true] %s17
      %23 = dma.hbm_to_vmem [thread:$0]  %s16, 256, %s18, [#allocation3], 64, 64, 4
    $region5: #{tpu_custom_call.1} parent=1 // pred_fallthru
      _
    // Predicated region
    $region6: #{tpu_custom_call.1} parent=1 // pred_check
      _
    $region7: #{tpu_custom_call.1} parent=1 // pred_check_branch
      %25 = sbr.rel (0) target = $region9
    $region8: #{tpu_custom_call.1} parent=1 // pred_region
      %27 = vsyncadd [#allocation6], 0
      %s28 = sshll.u32 %s1, 4
      %s29 = int_to_ptr.hbm [resolvable:$true] %s28
      %s30 = sshll.u32 [#allocation5], 4
      %s31 = int_to_ptr.vmem [resolvable:$true] %s30
      %36 = dma.hbm_to_vmem [thread:$0]  %s29, 1024, %s31, [#allocation6], 64, 64, 4
    $region9: #{tpu_custom_call.1} parent=1 // pred_fallthru
      _
    // Predicated region
    $region10: #{tpu_custom_call.1} parent=1 // pred_check
      _
    $region11: #{tpu_custom_call.1} parent=1 // pred_check_branch
      %38 = sbr.rel (0) target = $region13
    $region12: #{tpu_custom_call.1} parent=1 // pred_region
      %40 = vsyncadd [#allocation6], 0
      %s41 = sshll.u32 %s2, 4
      %s42 = int_to_ptr.hbm [resolvable:$true] %s41
      %s43 = sshll.u32 [#allocation7], 4
      %s44 = int_to_ptr.vmem [resolvable:$true] %s43
      %49 = dma.hbm_to_vmem [thread:$0]  %s42, 128, %s44, [#allocation6], 64, 64, 4
    $region13: #{tpu_custom_call.1} parent=1 // pred_fallthru
      _
    // Predicated region
    $region14: #{tpu_custom_call.1} parent=1 // pred_check
      _
    $region15: #{tpu_custom_call.1} parent=1 // pred_check_branch
      %51 = sbr.rel (0) target = $region17
    $region16: #{tpu_custom_call.1} parent=1 // pred_region
      %53 = dma.done [#allocation3], 256
    $region17: #{tpu_custom_call.1} parent=1 // pred_fallthru
      _
    // Predicated region
    $region18: #{tpu_custom_call.1} parent=1 // pred_check
      _
    $region19: #{tpu_custom_call.1} parent=1 // pred_check_branch
      %55 = sbr.rel (0) target = $region21
    $region20: #{tpu_custom_call.1} parent=1 // pred_region
      %57 = dma.done [#allocation6], 1024
    $region21: #{tpu_custom_call.1} parent=1 // pred_fallthru
      _
    // Predicated region
    $region22: #{tpu_custom_call.1} parent=1 // pred_check
      _
    $region23: #{tpu_custom_call.1} parent=1 // pred_check_branch
      %59 = sbr.rel (0) target = $region25
    $region24: #{tpu_custom_call.1} parent=1 // pred_region
      %61 = dma.done [#allocation6], 128
    $region25: #{tpu_custom_call.1} parent=1 // pred_fallthru
      _
    %v62 = vld [vmem:[#allocation2] sm:$0xf]
    %v63 = vld [vmem:[#allocation2 + $0x4] sm:$0xf]
    %v64 = vld [vmem:[#allocation2 + $0x8] sm:$0xf]
    %v65 = vld [vmem:[#allocation2 + $0xc] sm:$0xf]
    %v66 = vld [vmem:[#allocation5] sm:$0xf]
    %v67 = vld [vmem:[#allocation5 + $0x4] sm:$0xf]
    %v68 = vld [vmem:[#allocation5 + $0x8] sm:$0xf]
    %v69 = vld [vmem:[#allocation5 + $0xc] sm:$0xf]
    %v70 = vld [vmem:[#allocation5 + $0x10] sm:$0xf]
    %v71 = vld [vmem:[#allocation5 + $0x14] sm:$0xf]
    %v72 = vld [vmem:[#allocation5 + $0x18] sm:$0xf]
    %v73 = vld [vmem:[#allocation5 + $0x1c] sm:$0xf]
    %v74 = vld [vmem:[#allocation5 + $0x20] sm:$0xf]
    %v75 = vld [vmem:[#allocation5 + $0x24] sm:$0xf]
    %v76 = vld [vmem:[#allocation5 + $0x28] sm:$0xf]
    %v77 = vld [vmem:[#allocation5 + $0x2c] sm:$0xf]
    %v78 = vld [vmem:[#allocation5 + $0x30] sm:$0xf]
    %v79 = vld [vmem:[#allocation5 + $0x34] sm:$0xf]
    %v80 = vld [vmem:[#allocation5 + $0x38] sm:$0xf]
    %v81 = vld [vmem:[#allocation5 + $0x3c] sm:$0xf]
    %v82 = vld [vmem:[#allocation7] sm:$0xf]
    %v83 = vld [vmem:[#allocation7 + $0x4] sm:$0xf]
    %v84 = vunpack.c.l.bf16 %v82
    %v85 = vunpack.c.l.bf16 %v83
    %v90 = vunpack.c.l.b16 %v62
    %v91 = vunpack.c.l.b16 %v63
    %v92 = vunpack.c.l.b16 %v64
    %v93 = vunpack.c.l.b16 %v65
    %v94 = vpack.c.b16 %v91, %v90
    %v95 = vpack.c.b16 %v93, %v92
    %v114 = vunpack.c.l.b16 %v66
    %v115 = vunpack.c.l.b16 %v67
    %v116 = vunpack.c.l.b16 %v68
    %v117 = vunpack.c.l.b16 %v69
    %v118 = vunpack.c.l.b16 %v70
    %v119 = vunpack.c.l.b16 %v71
    %v120 = vunpack.c.l.b16 %v72
    %v121 = vunpack.c.l.b16 %v73
    %v122 = vunpack.c.l.b16 %v74
    %v123 = vunpack.c.l.b16 %v75
    %v124 = vunpack.c.l.b16 %v76
    %v125 = vunpack.c.l.b16 %v77
    %v126 = vunpack.c.l.b16 %v78
    %v127 = vunpack.c.l.b16 %v79
    %v128 = vunpack.c.l.b16 %v80
    %v129 = vunpack.c.l.b16 %v81
    %v130 = vpack.c.b16 %v115, %v114
    %v131 = vpack.c.b16 %v117, %v116
    %v132 = vpack.c.b16 %v119, %v118
    %v133 = vpack.c.b16 %v121, %v120
    %v134 = vpack.c.b16 %v123, %v122
    %v135 = vpack.c.b16 %v125, %v124
    %v136 = vpack.c.b16 %v127, %v126
    %v137 = vpack.c.b16 %v129, %v128
    %146 = vmatpush.bf16.msra.mxu0 %v137
    %147 = vmatpush.bf16.msra.mxu0 %v136
    %148 = vmatpush.bf16.msra.mxu0 %v135
    %149 = vmatpush.bf16.msra.mxu0 %v134
    %150 = vmatpush.bf16.msra.mxu0 %v133
    %151 = vmatpush.bf16.msra.mxu0 %v132
    %152 = vmatpush.bf16.msra.mxu0 %v131
    %153 = vmatpush.bf16.msra.mxu0 %v130
    %154 = vmatmul.bf16.gmra.mxu0 %v94
    %v155 = vpop.f32.mrf.mxu0
    %v156 = vadd.f32 %v84, %v155
    %v157 = vpop.f32.mrf.mxu0
    %v158 = vadd.f32 %v85, %v157
    %159 = vmatmul.bf16.gmra.mxu0 %v95
    %v160 = vpop.f32.mrf.mxu0
    %v161 = vadd.f32 %v84, %v160
    %v162 = vpop.f32.mrf.mxu0
    %v163 = vadd.f32 %v85, %v162
    %164 = vdwg.mxu0
    %165 = vst [vmem:[#allocation8] sm:$0xff] %v156
    %166 = vst [vmem:[#allocation8 + $0x8] sm:$0xff] %v158
    %167 = vst [vmem:[#allocation8 + $0x10] sm:$0xff] %v161
    %168 = vst [vmem:[#allocation8 + $0x18] sm:$0xff] %v163
    // Predicated region
    $region26: #{tpu_custom_call.1} parent=1 // pred_check
      _
    $region27: #{tpu_custom_call.1} parent=1 // pred_check_branch
      %170 = sbr.rel (0) target = $region29
    $region28: #{tpu_custom_call.1} parent=1 // pred_region
      %172 = vsyncadd [#allocation4], 0
      %s173 = sshll.u32 [#allocation8], 4
      %s174 = int_to_ptr.vmem [resolvable:$true] %s173
      %s175 = sshll.u32 %s3, 4
      %s176 = int_to_ptr.hbm [resolvable:$true] %s175
      %181 = dma.vmem_to_hbm [thread:$0]  %s174, 512, %s176, [#allocation4], 128, 128, 8
    $region29: #{tpu_custom_call.1} parent=1 // pred_fallthru
      _
    // Predicated region
    $region30: #{tpu_custom_call.1} parent=1 // pred_check
      _
    $region31: #{tpu_custom_call.1} parent=1 // pred_check_branch
      %183 = sbr.rel (0) target = $region33
    $region32: #{tpu_custom_call.1} parent=1 // pred_region
      %185 = dma.done [#allocation4], 512
    $region33: #{tpu_custom_call.1} parent=1 // pred_fallthru
      _
    %186 = vsyncpa [#allocation3], 1
    %187 = vsyncpa [#allocation6], 1
    %188 = vsyncpa [#allocation4], 1

</llo_original>
